<compile_context>
chip_gen: v5e
topology: v5e:2x2
jax: 0.10.0
libtpu: 0.0.40
codegen_flags: <defaults>
</compile_context>

<pallas_src>
import functools

import jax
import jax.numpy as jnp
from jax.experimental import pallas as pl
from jax.experimental.pallas import tpu as pltpu

HIDDEN = 100
HIDDEN_PAD = 128        # pad hidden dim to the 128-lane vreg width
OUT_PAD = 128           # pad the softmax/output dim to a full lane group (lane-dense stores)
IN_ALIGN = 16           # pad the tiny input feature dim to a bf16-sublane-friendly width
NEG_BIAS = -1e30        # bias for the padded softmax lanes: exp(-1e30 - m) == 0 exactly
MAX_TB = 2048           # max rows per batch block (VMEM footprint stays a few MiB)


def _round_up(n, m):
    return ((n + m - 1) // m) * m


def _choose_tiling(B):
    """Pad batch to a multiple of 128; pick TB as the largest multiple-of-128 divisor of
    B_pad that is <= MAX_TB rows, preferring >= 2 grid blocks (v7x has 2 TensorCores)."""
    B_pad = _round_up(max(B, 1), 128)
    n_chunks = B_pad // 128
    if n_chunks == 1:
        return B_pad, 128
    TB = 128
    for nb in range(2, n_chunks + 1):          # smallest block count >= 2 -> largest TB
        if n_chunks % nb == 0 and (B_pad // nb) <= MAX_TB:
            TB = B_pad // nb
            break
    return B_pad, TB


def pg_learner_kernel(x_ref, w1_ref, b1_ref, w2_ref, b2_ref, w3_ref, b3_ref, o_ref):
    # x block: [TB, IN_PAD] bf16 ; weights bf16 (hidden/out padded to 128) ; biases f32
    x = x_ref[...]

    # fc1 + relu   -> [TB, 128]
    h1 = jnp.dot(x, w1_ref[...], preferred_element_type=jnp.float32) + b1_ref[...]
    h1 = jnp.maximum(h1, 0.0)

    # fc2 + relu   -> [TB, 128]
    h2 = jnp.dot(h1.astype(jnp.bfloat16), w2_ref[...],
                 preferred_element_type=jnp.float32) + b2_ref[...]
    h2 = jnp.maximum(h2, 0.0)

    # fc3          -> [TB, 128]   (padded logit lanes sit at ~ -1e30 via b3 padding)
    logits = jnp.dot(h2.astype(jnp.bfloat16), w3_ref[...],
                     preferred_element_type=jnp.float32) + b3_ref[...]

    # softmax over last dim; padded lanes contribute exp(-1e30 - m) == 0 to the sum
    m = jnp.max(logits, axis=-1, keepdims=True)
    e = jnp.exp(logits - m)
    inv = pl.reciprocal(jnp.sum(e, axis=-1, keepdims=True), approx=True)  # EUP slot
    o_ref[...] = e * inv


def prepare_params(params, hidden_pad=HIDDEN_PAD, out_pad=OUT_PAD):
    """Pad hidden 100->128 and out_dim->128; pad in_dim to IN_ALIGN. Zero padding is
    inert under ReLU / the matmuls; the padded *b3* lanes get NEG_BIAS so they vanish
    from the softmax. Matmul weights cast to bf16; biases stay f32."""
    w1, b1, w2, b2, w3, b3 = params
    in_dim, h = w1.shape
    out_dim = w3.shape[1]
    in_pad = _round_up(in_dim, IN_ALIGN)
    w1p = jnp.zeros((in_pad, hidden_pad), jnp.float32).at[:in_dim, :h].set(w1).astype(jnp.bfloat16)
    b1p = jnp.zeros((1, hidden_pad), jnp.float32).at[:, :h].set(b1.reshape(1, -1))
    w2p = jnp.zeros((hidden_pad, hidden_pad), jnp.float32).at[:h, :h].set(w2).astype(jnp.bfloat16)
    b2p = jnp.zeros((1, hidden_pad), jnp.float32).at[:, :h].set(b2.reshape(1, -1))
    w3p = jnp.zeros((hidden_pad, out_pad), jnp.float32).at[:h, :out_dim].set(w3).astype(jnp.bfloat16)
    b3p = jnp.full((1, out_pad), NEG_BIAS, jnp.float32).at[:, :out_dim].set(b3.reshape(1, -1))
    return w1p, b1p, w2p, b2p, w3p, b3p


@functools.partial(jax.jit, static_argnames=("TB",))
def _pg_learner_forward_padded(x_pad, w1p, b1p, w2p, b2p, w3p, b3p, *, TB):
    B_pad, in_pad = x_pad.shape
    H = w1p.shape[1]
    out_pad = w3p.shape[1]
    grid = (B_pad // TB,)

    flops = 2 * B_pad * (in_pad * H + H * H + H * out_pad)
    transcendentals = B_pad * (out_pad + 1)                 # exp per (padded) logit + recip/row
    bytes_accessed = (B_pad * in_pad * 2 + B_pad * out_pad * 4
                      + (w1p.size + w2p.size + w3p.size) * 2
                      + (b1p.size + b2p.size + b3p.size) * 4)

    return pl.pallas_call(
        pg_learner_kernel,
        out_shape=jax.ShapeDtypeStruct((B_pad, out_pad), jnp.float32),
        grid=grid,
        in_specs=[
            pl.BlockSpec((TB, in_pad), lambda i: (i, 0)),     # x: batch-tiled, pipelined
            pl.BlockSpec((in_pad, H), lambda i: (0, 0)),      # w1: VMEM-resident (DMA'd once)
            pl.BlockSpec((1, H), lambda i: (0, 0)),           # b1
            pl.BlockSpec((H, H), lambda i: (0, 0)),           # w2
            pl.BlockSpec((1, H), lambda i: (0, 0)),           # b2
            pl.BlockSpec((H, out_pad), lambda i: (0, 0)),     # w3
            pl.BlockSpec((1, out_pad), lambda i: (0, 0)),     # b3
        ],
        out_specs=pl.BlockSpec((TB, out_pad), lambda i: (i, 0)),   # lane-dense 128-wide stores
        compiler_params=pltpu.CompilerParams(
            dimension_semantics=("parallel",),            # shard batch blocks across TCs (v7x)
            vmem_limit_bytes=32 * 1024 * 1024,            # explicit, fits v5e/v6e/v7x budgets
        ),
        cost_estimate=pl.CostEstimate(
            flops=int(flops),
            transcendentals=int(transcendentals),
            bytes_accessed=int(bytes_accessed),
        ),
    )(x_pad, w1p, b1p, w2p, b2p, w3p, b3p)


def pg_learner_forward(x, params):
    """x: [B, num_actions+1] f32. Returns softmax probs [B, num_actions+2] f32."""
    w1 = params[0]
    out_dim = params[4].shape[1]
    in_dim = w1.shape[0]
    prepped = prepare_params(params)
    in_pad = prepped[0].shape[0]

    B = x.shape[0]
    B_pad, TB = _choose_tiling(B)
    # zero-pad batch rows / feature lanes and cast to bf16 host-side (pad rows are inert)
    x_pad = jnp.zeros((B_pad, in_pad), jnp.bfloat16).at[:B, :in_dim].set(
        x.astype(jnp.bfloat16))
    out = _pg_learner_forward_padded(x_pad, *prepped, TB=TB)
    return out[:B, :out_dim]


def init_params(key, num_actions):
    """Deterministic init mimicking nn.Linear default (U[-1/sqrt(fan_in), 1/sqrt(fan_in)]).
    Weights are stored as [in_features, out_features] (transposed vs. PyTorch storage)."""
    in_dim = num_actions + 1
    out_dim = num_actions + 2
    dims = [(in_dim, HIDDEN), (HIDDEN, HIDDEN), (HIDDEN, out_dim)]
    params = []
    for i, (fan_in, fan_out) in enumerate(dims):
        kw, kb = jax.random.split(jax.random.fold_in(key, i))
        bound = 1.0 / jnp.sqrt(jnp.float32(fan_in))
        w = jax.random.uniform(kw, (fan_in, fan_out), jnp.float32, -bound, bound)
        b = jax.random.uniform(kb, (1, fan_out), jnp.float32, -bound, bound)
        params += [w, b]
    return tuple(params)


def reference_forward(x, params):
    w1, b1, w2, b2, w3, b3 = params
    h1 = jnp.maximum(x @ w1 + b1, 0.0)
    h2 = jnp.maximum(h1 @ w2 + b2, 0.0)
    logits = h2 @ w3 + b3
    return jax.nn.softmax(logits, axis=-1)


# TODO(synk): Categorical sampling / log_prob in PGLearner.action() and the reward
# bookkeeping in step() are host-side RL glue, not part of forward(); not ported.

if __name__ == "__main__":
    num_actions = 4          # -> input_length = 5, output_length = 6
    batch = 2

    key = jax.random.PRNGKey(0)
    kx, kp = jax.random.split(key)
    params = init_params(kp, num_actions)
    x = jax.random.normal(kx, (batch, num_actions + 1), jnp.float32)

    out = pg_learner_forward(x, params)
    out = jax.block_until_ready(out)

    ref = reference_forward(x, params)
    assert out.shape == (batch, num_actions + 2)
    # bf16 matmul operands + approx reciprocal -> compare against f32 ref with looser tolerance
    assert jnp.allclose(out, ref, atol=2e-2, rtol=2e-2)
    assert jnp.allclose(jnp.sum(out, axis=-1), 1.0, atol=1e-2)

    # exercise the multi-block pipelined path (grid > 1, B not a multiple of 128)
    big_B = 600
    xb = jax.random.normal(jax.random.fold_in(kx, 1), (big_B, num_actions + 1), jnp.float32)
    out_big = jax.block_until_ready(pg_learner_forward(xb, params))
    ref_big = reference_forward(xb, params)
    assert out_big.shape == (big_B, num_actions + 2)
    assert jnp.allclose(out_big, ref_big, atol=2e-2, rtol=2e-2)
    assert jnp.allclose(jnp.sum(out_big, axis=-1), 1.0, atol=1e-2)

    print("KERNEL_OK")
</pallas_src>

<mosaic_0001>
module attributes {stable_mosaic.version = 11 : i64} {
  func.func @pg_learner_kernel(%arg0: i32, %arg1: memref<128x16xbf16, #tpu.memory_space<vmem>>, %arg2: memref<16x128xbf16, #tpu.memory_space<vmem>>, %arg3: memref<1x128xf32, #tpu.memory_space<vmem>>, %arg4: memref<128x128xbf16, #tpu.memory_space<vmem>>, %arg5: memref<1x128xf32, #tpu.memory_space<vmem>>, %arg6: memref<128x128xbf16, #tpu.memory_space<vmem>>, %arg7: memref<1x128xf32, #tpu.memory_space<vmem>>, %arg8: memref<128x128xf32, #tpu.memory_space<vmem>>) attributes {dimension_semantics = [#tpu.dimension_semantics<parallel>], iteration_bounds = array<i64: 1>, scalar_prefetch = 0 : i64, scratch_operands = 0 : i64, tpu.core_type = #tpu.core_type<tc>, window_params = [{transform_indices = @transform_0, window_bounds = array<i64: 128, 16>}, {pipeline_mode = #tpu.pipeline_mode<synchronous>, transform_indices = @transform_1, window_bounds = array<i64: 16, 128>}, {pipeline_mode = #tpu.pipeline_mode<synchronous>, transform_indices = @transform_2, window_bounds = array<i64: 1, 128>}, {pipeline_mode = #tpu.pipeline_mode<synchronous>, transform_indices = @transform_3, window_bounds = array<i64: 128, 128>}, {pipeline_mode = #tpu.pipeline_mode<synchronous>, transform_indices = @transform_4, window_bounds = array<i64: 1, 128>}, {pipeline_mode = #tpu.pipeline_mode<synchronous>, transform_indices = @transform_5, window_bounds = array<i64: 128, 128>}, {pipeline_mode = #tpu.pipeline_mode<synchronous>, transform_indices = @transform_6, window_bounds = array<i64: 1, 128>}, {transform_indices = @transform_7, window_bounds = array<i64: 128, 128>}]} {
    %c0 = arith.constant 0 : index
    %c0_0 = arith.constant 0 : index
    %0 = vector.load %arg1[%c0, %c0_0] : memref<128x16xbf16, #tpu.memory_space<vmem>>, vector<128x16xbf16>
    %c0_1 = arith.constant 0 : index
    %c0_2 = arith.constant 0 : index
    %1 = vector.load %arg2[%c0_1, %c0_2] : memref<16x128xbf16, #tpu.memory_space<vmem>>, vector<16x128xbf16>
    %cst = arith.constant dense<0.000000e+00> : vector<128x128xf32>
    %2 = tpu.matmul %0, %1, %cst {dimension_numbers = #tpu.dot_dimension_numbers<[1], [0], [0], [1], [0, 0, 1, 1], [], []>} : vector<128x16xbf16>, vector<16x128xbf16>, vector<128x128xf32> -> vector<128x128xf32>
    %c0_3 = arith.constant 0 : index
    %c0_4 = arith.constant 0 : index
    %3 = vector.load %arg3[%c0_3, %c0_4] : memref<1x128xf32, #tpu.memory_space<vmem>>, vector<1x128xf32>
    %4 = vector.broadcast %3 : vector<1x128xf32> to vector<128x128xf32>
    %5 = arith.addf %2, %4 : vector<128x128xf32>
    %cst_5 = arith.constant 0.000000e+00 : f32
    %6 = vector.broadcast %cst_5 : f32 to vector<128x128xf32>
    %7 = arith.maximumf %5, %6 : vector<128x128xf32>
    %8 = arith.truncf %7 : vector<128x128xf32> to vector<128x128xbf16>
    %c0_6 = arith.constant 0 : index
    %c0_7 = arith.constant 0 : index
    %9 = vector.load %arg4[%c0_6, %c0_7] : memref<128x128xbf16, #tpu.memory_space<vmem>>, vector<128x128xbf16>
    %cst_8 = arith.constant dense<0.000000e+00> : vector<128x128xf32>
    %10 = tpu.matmul %8, %9, %cst_8 {dimension_numbers = #tpu.dot_dimension_numbers<[1], [0], [0], [1], [0, 0, 1, 1], [], []>} : vector<128x128xbf16>, vector<128x128xbf16>, vector<128x128xf32> -> vector<128x128xf32>
    %c0_9 = arith.constant 0 : index
    %c0_10 = arith.constant 0 : index
    %11 = vector.load %arg5[%c0_9, %c0_10] : memref<1x128xf32, #tpu.memory_space<vmem>>, vector<1x128xf32>
    %12 = vector.broadcast %11 : vector<1x128xf32> to vector<128x128xf32>
    %13 = arith.addf %10, %12 : vector<128x128xf32>
    %cst_11 = arith.constant 0.000000e+00 : f32
    %14 = vector.broadcast %cst_11 : f32 to vector<128x128xf32>
    %15 = arith.maximumf %13, %14 : vector<128x128xf32>
    %16 = arith.truncf %15 : vector<128x128xf32> to vector<128x128xbf16>
    %c0_12 = arith.constant 0 : index
    %c0_13 = arith.constant 0 : index
    %17 = vector.load %arg6[%c0_12, %c0_13] : memref<128x128xbf16, #tpu.memory_space<vmem>>, vector<128x128xbf16>
    %cst_14 = arith.constant dense<0.000000e+00> : vector<128x128xf32>
    %18 = tpu.matmul %16, %17, %cst_14 {dimension_numbers = #tpu.dot_dimension_numbers<[1], [0], [0], [1], [0, 0, 1, 1], [], []>} : vector<128x128xbf16>, vector<128x128xbf16>, vector<128x128xf32> -> vector<128x128xf32>
    %c0_15 = arith.constant 0 : index
    %c0_16 = arith.constant 0 : index
    %19 = vector.load %arg7[%c0_15, %c0_16] : memref<1x128xf32, #tpu.memory_space<vmem>>, vector<1x128xf32>
    %20 = vector.broadcast %19 : vector<1x128xf32> to vector<128x128xf32>
    %21 = arith.addf %18, %20 : vector<128x128xf32>
    %cst_17 = arith.constant dense<0xFF800000> : vector<128xf32>
    %22 = vector.multi_reduction <maximumf>, %21, %cst_17 [1] : vector<128x128xf32> to vector<128xf32>
    %23 = vector.shape_cast %22 : vector<128xf32> to vector<128x1xf32>
    %24 = vector.broadcast %23 : vector<128x1xf32> to vector<128x128xf32>
    %25 = arith.subf %21, %24 : vector<128x128xf32>
    %26 = math.exp %25 : vector<128x128xf32>
    %cst_18 = arith.constant dense<0.000000e+00> : vector<128xf32>
    %27 = vector.multi_reduction <add>, %26, %cst_18 [1] : vector<128x128xf32> to vector<128xf32>
    %28 = vector.shape_cast %27 : vector<128xf32> to vector<128x1xf32>
    %29 = tpu.reciprocal %28 {approx = true} : vector<128x1xf32> -> vector<128x1xf32>
    %30 = vector.broadcast %29 : vector<128x1xf32> to vector<128x128xf32>
    %31 = arith.mulf %26, %30 : vector<128x128xf32>
    %c0_19 = arith.constant 0 : index
    %c0_20 = arith.constant 0 : index
    %32 = vector.load %arg8[%c0_19, %c0_20] : memref<128x128xf32, #tpu.memory_space<vmem>>, vector<128x128xf32>
    tpu.vector_store %arg8[%c0_19, %c0_20], %31 {strides = array<i32>} : memref<128x128xf32, #tpu.memory_space<vmem>>, vector<128x128xf32>,
    return
  }
  func.func @transform_0(%arg0: i32) -> (i32, i32) {
    %c0_i32 = arith.constant 0 : i32
    %c0_i32_0 = arith.constant 0 : i32
    return %arg0, %c0_i32 : i32, i32
  }
  func.func @transform_1(%arg0: i32) -> (i32, i32) {
    %c0_i32 = arith.constant 0 : i32
    %c0_i32_0 = arith.constant 0 : i32
    %c0_i32_1 = arith.constant 0 : i32
    return %c0_i32, %c0_i32_0 : i32, i32
  }
  func.func @transform_2(%arg0: i32) -> (i32, i32) {
    %c0_i32 = arith.constant 0 : i32
    %c0_i32_0 = arith.constant 0 : i32
    %c0_i32_1 = arith.constant 0 : i32
    return %c0_i32, %c0_i32_0 : i32, i32
  }
  func.func @transform_3(%arg0: i32) -> (i32, i32) {
    %c0_i32 = arith.constant 0 : i32
    %c0_i32_0 = arith.constant 0 : i32
    %c0_i32_1 = arith.constant 0 : i32
    return %c0_i32, %c0_i32_0 : i32, i32
  }
  func.func @transform_4(%arg0: i32) -> (i32, i32) {
    %c0_i32 = arith.constant 0 : i32
    %c0_i32_0 = arith.constant 0 : i32
    %c0_i32_1 = arith.constant 0 : i32
    return %c0_i32, %c0_i32_0 : i32, i32
  }
  func.func @transform_5(%arg0: i32) -> (i32, i32) {
    %c0_i32 = arith.constant 0 : i32
    %c0_i32_0 = arith.constant 0 : i32
    %c0_i32_1 = arith.constant 0 : i32
    return %c0_i32, %c0_i32_0 : i32, i32
  }
  func.func @transform_6(%arg0: i32) -> (i32, i32) {
    %c0_i32 = arith.constant 0 : i32
    %c0_i32_0 = arith.constant 0 : i32
    %c0_i32_1 = arith.constant 0 : i32
    return %c0_i32, %c0_i32_0 : i32, i32
  }
  func.func @transform_7(%arg0: i32) -> (i32, i32) {
    %c0_i32 = arith.constant 0 : i32
    %c0_i32_0 = arith.constant 0 : i32
    return %arg0, %c0_i32 : i32, i32
  }
}

</mosaic_0001>

<llo_original>
// kernel: _pg_learner_forward_padded.1
$region0: #{_pg_learner_forward_padded.1}
  #allocation0 [shape = 'u32[]', space=smem, size = 0x4, offset = 0x4, fixed_abs, tag = 'smem constant byte address 0x4 - core index']
  #allocation1 [shape = 'u32[72,128]{1,0:T(1,128)}', space=vmem, size = 0x9000, scoped, tag = 'internal scratch']
  %s0 = inlined_call_operand.vmem [shape: bf16[128,16], index: 0, kind: input, shape index: {}]
  %s1 = inlined_call_operand.vmem [shape: bf16[16,128], index: 1, kind: input, shape index: {}]
  %s2 = inlined_call_operand.vmem [shape: f32[1,128], index: 2, kind: input, shape index: {}]
  %s3 = inlined_call_operand.vmem [shape: bf16[128,128], index: 3, kind: input, shape index: {}]
  %s4 = inlined_call_operand.vmem [shape: f32[1,128], index: 4, kind: input, shape index: {}]
  %s5 = inlined_call_operand.hbm [shape: bf16[128,128], index: 5, kind: input, shape index: {}]
  %s6 = inlined_call_operand.vmem [shape: f32[1,128], index: 6, kind: input, shape index: {}]
  %s7 = inlined_call_operand.hbm [shape: f32[128,128], index: 7, kind: output, shape index: {}]
  %s8 = sld [smem:[#allocation0]]
  $region42: #{_pg_learner_forward_padded.1} parent=0
    _
  %s10 = ssub.s32 1, %s8
  %s11 = scalar_select 0, %s10, %s8
  $region1: #{_pg_learner_forward_padded.1} parent=0
    #allocation2 [shape = 'u8[32768]{0}', space=vmem, size = 0x8000, scoped, tag = 'input window, operand 5, single buffered']
    #allocation3 [shape = 's32[1]{0}', space=sflag, size = 0x4, scoped, tag = 'scoped memory for _pg_learner_forward_padded.1']
    #allocation4 [shape = 's32[1]{0}', space=sflag, size = 0x4, scoped, tag = 'scoped memory for _pg_learner_forward_padded.1']
    #allocation5 [shape = 'u8[65536]{0}', space=vmem, size = 0x10000, scoped, tag = 'output window, operand 0, single buffered']
    %12 = vsyncpa [#allocation3], 0
    %13 = vsyncpa [#allocation4], 0
    // Predicated region
    $region2: #{_pg_learner_forward_padded.1} parent=1 // pred_check
      _
    $region3: #{_pg_learner_forward_padded.1} parent=1 // pred_check_branch
      %15 = sbr.rel (0) target = $region5
    $region4: #{_pg_learner_forward_padded.1} parent=1 // pred_region
      _
    $region5: #{_pg_learner_forward_padded.1} parent=1 // pred_fallthru
      _
    // Predicated region
    $region6: #{_pg_learner_forward_padded.1} parent=1 // pred_check
      _
    $region7: #{_pg_learner_forward_padded.1} parent=1 // pred_check_branch
      %17 = sbr.rel (0) target = $region9
    $region8: #{_pg_learner_forward_padded.1} parent=1 // pred_region
      _
    $region9: #{_pg_learner_forward_padded.1} parent=1 // pred_fallthru
      _
    // Predicated region
    $region10: #{_pg_learner_forward_padded.1} parent=1 // pred_check
      _
    $region11: #{_pg_learner_forward_padded.1} parent=1 // pred_check_branch
      %19 = sbr.rel (0) target = $region13
    $region12: #{_pg_learner_forward_padded.1} parent=1 // pred_region
      _
    $region13: #{_pg_learner_forward_padded.1} parent=1 // pred_fallthru
      _
    // Predicated region
    $region14: #{_pg_learner_forward_padded.1} parent=1 // pred_check
      _
    $region15: #{_pg_learner_forward_padded.1} parent=1 // pred_check_branch
      %21 = sbr.rel (0) target = $region17
    $region16: #{_pg_learner_forward_padded.1} parent=1 // pred_region
      _
    $region17: #{_pg_learner_forward_padded.1} parent=1 // pred_fallthru
      _
    // Predicated region
    $region18: #{_pg_learner_forward_padded.1} parent=1 // pred_check
      _
    $region19: #{_pg_learner_forward_padded.1} parent=1 // pred_check_branch
      %23 = sbr.rel (0) target = $region21
    $region20: #{_pg_learner_forward_padded.1} parent=1 // pred_region
      _
    $region21: #{_pg_learner_forward_padded.1} parent=1 // pred_fallthru
      _
    // Predicated region
    $region22: #{_pg_learner_forward_padded.1} parent=1 // pred_check
      _
    $region23: #{_pg_learner_forward_padded.1} parent=1 // pred_check_branch
      %25 = sbr.rel (0) target = $region25
    $region24: #{_pg_learner_forward_padded.1} parent=1 // pred_region
      %27 = vsyncadd [#allocation3], 0
      %s28 = sshll.u32 %s5, 4
      %s29 = int_to_ptr.hbm [resolvable:$true] %s28
      %s30 = sshll.u32 [#allocation2], 4
      %s31 = int_to_ptr.vmem [resolvable:$true] %s30
      %36 = dma.hbm_to_vmem [thread:$0]  %s29, 1024, %s31, [#allocation3], 64, 64, 4
    $region25: #{_pg_learner_forward_padded.1} parent=1 // pred_fallthru
      _
    // Predicated region
    $region26: #{_pg_learner_forward_padded.1} parent=1 // pred_check
      _
    $region27: #{_pg_learner_forward_padded.1} parent=1 // pred_check_branch
      %38 = sbr.rel (0) target = $region29
    $region28: #{_pg_learner_forward_padded.1} parent=1 // pred_region
      _
    $region29: #{_pg_learner_forward_padded.1} parent=1 // pred_fallthru
      _
    // Predicated region
    $region30: #{_pg_learner_forward_padded.1} parent=1 // pred_check
      _
    $region31: #{_pg_learner_forward_padded.1} parent=1 // pred_check_branch
      %40 = sbr.rel (0) target = $region33
    $region32: #{_pg_learner_forward_padded.1} parent=1 // pred_region
      %42 = dma.done [#allocation3], 1024
    $region33: #{_pg_learner_forward_padded.1} parent=1 // pred_fallthru
      _
    %v44 = vld [vmem:[%s0] sm:$0xf]
    %v45 = vld [vmem:[%s0 + $0x4] sm:$0xf]
    %v46 = vld [vmem:[%s0 + $0x8] sm:$0xf]
    %v47 = vld [vmem:[%s0 + $0xc] sm:$0xf]
    %v48 = vld [vmem:[%s0 + $0x10] sm:$0xf]
    %v49 = vld [vmem:[%s0 + $0x14] sm:$0xf]
    %v50 = vld [vmem:[%s0 + $0x18] sm:$0xf]
    %v51 = vld [vmem:[%s0 + $0x1c] sm:$0xf]
    %v52 = vld [vmem:[%s0 + $0x20] sm:$0xf]
    %v53 = vld [vmem:[%s0 + $0x24] sm:$0xf]
    %v54 = vld [vmem:[%s0 + $0x28] sm:$0xf]
    %v55 = vld [vmem:[%s0 + $0x2c] sm:$0xf]
    %v56 = vld [vmem:[%s0 + $0x30] sm:$0xf]
    %v57 = vld [vmem:[%s0 + $0x34] sm:$0xf]
    %v58 = vld [vmem:[%s0 + $0x38] sm:$0xf]
    %v59 = vld [vmem:[%s0 + $0x3c] sm:$0xf]
    %v60 = vld [vmem:[%s1] sm:$0xf]
    %v61 = vld [vmem:[%s1 + $0x4] sm:$0xf]
    %v62 = vld [vmem:[%s2] sm:$0x1]
    %v64 = vperm.slane %v62, 0
    %v82 = vunpack.c.l.b16 %v44
    %v83 = vunpack.c.l.b16 %v45
    %v84 = vunpack.c.l.b16 %v46
    %v85 = vunpack.c.l.b16 %v47
    %v86 = vunpack.c.l.b16 %v48
    %v87 = vunpack.c.l.b16 %v49
    %v88 = vunpack.c.l.b16 %v50
    %v89 = vunpack.c.l.b16 %v51
    %v90 = vunpack.c.l.b16 %v52
    %v91 = vunpack.c.l.b16 %v53
    %v92 = vunpack.c.l.b16 %v54
    %v93 = vunpack.c.l.b16 %v55
    %v94 = vunpack.c.l.b16 %v56
    %v95 = vunpack.c.l.b16 %v57
    %v96 = vunpack.c.l.b16 %v58
    %v97 = vunpack.c.l.b16 %v59
    %v98 = vpack.c.b16 %v83, %v82
    %v99 = vpack.c.b16 %v85, %v84
    %v100 = vpack.c.b16 %v87, %v86
    %v101 = vpack.c.b16 %v89, %v88
    %v102 = vpack.c.b16 %v91, %v90
    %v103 = vpack.c.b16 %v93, %v92
    %v104 = vpack.c.b16 %v95, %v94
    %v105 = vpack.c.b16 %v97, %v96
    %v108 = vunpack.c.l.b16 %v60
    %v109 = vunpack.c.l.b16 %v61
    %v110 = vpack.c.b16 %v109, %v108
    %vm112 = vcmask 130048
    %v114 = vsel %vm112, %v98, 0
    %v117 = vsel %vm112, %v99, 0
    %v120 = vsel %vm112, %v100, 0
    %v123 = vsel %vm112, %v101, 0
    %v126 = vsel %vm112, %v102, 0
    %v129 = vsel %vm112, %v103, 0
    %v132 = vsel %vm112, %v104, 0
    %v135 = vsel %vm112, %v105, 0
    %137 = vmatpush.bf16.msra.mxu0 0
    %138 = vmatpush.bf16.msra.mxu0 0
    %139 = vmatpush.bf16.msra.mxu0 0
    %140 = vmatpush.bf16.msra.mxu0 0
    %141 = vmatpush.bf16.msra.mxu0 0
    %142 = vmatpush.bf16.msra.mxu0 0
    %143 = vmatpush.bf16.msra.mxu0 0
    %144 = vmatpush.bf16.msra.mxu0 %v110
    %145 = vmatmul.bf16.gmra.mxu0 %v114
    %v146 = vpop.f32.mrf.mxu0
    %v147 = vadd.f32 %v64, %v146
    %v148 = vpop.f32.mrf.mxu0
    %v149 = vadd.f32 %v64, %v148
    %150 = vmatmul.bf16.gmra.mxu0 %v117
    %v151 = vpop.f32.mrf.mxu0
    %v152 = vadd.f32 %v64, %v151
    %v153 = vpop.f32.mrf.mxu0
    %v154 = vadd.f32 %v64, %v153
    %155 = vmatmul.bf16.gmra.mxu0 %v120
    %v156 = vpop.f32.mrf.mxu0
    %v157 = vadd.f32 %v64, %v156
    %v158 = vpop.f32.mrf.mxu0
    %v159 = vadd.f32 %v64, %v158
    %160 = vmatmul.bf16.gmra.mxu0 %v123
    %v161 = vpop.f32.mrf.mxu0
    %v162 = vadd.f32 %v64, %v161
    %v163 = vpop.f32.mrf.mxu0
    %v164 = vadd.f32 %v64, %v163
    %165 = vmatmul.bf16.gmra.mxu0 %v126
    %v166 = vpop.f32.mrf.mxu0
    %v167 = vadd.f32 %v64, %v166
    %v168 = vpop.f32.mrf.mxu0
    %v169 = vadd.f32 %v64, %v168
    %170 = vmatmul.bf16.gmra.mxu0 %v129
    %v171 = vpop.f32.mrf.mxu0
    %v172 = vadd.f32 %v64, %v171
    %v173 = vpop.f32.mrf.mxu0
    %v174 = vadd.f32 %v64, %v173
    %175 = vmatmul.bf16.gmra.mxu0 %v132
    %v176 = vpop.f32.mrf.mxu0
    %v177 = vadd.f32 %v64, %v176
    %v178 = vpop.f32.mrf.mxu0
    %v179 = vadd.f32 %v64, %v178
    %180 = vmatmul.bf16.gmra.mxu0 %v135
    %v181 = vpop.f32.mrf.mxu0
    %v182 = vadd.f32 %v64, %v181
    %v183 = vpop.f32.mrf.mxu0
    %v184 = vadd.f32 %v64, %v183
    %185 = vdwg.mxu0
    %v186 = vmax.f32 %v147, 0.0
    %v187 = vmax.f32 %v149, 0.0
    %v188 = vmax.f32 %v152, 0.0
    %v189 = vmax.f32 %v154, 0.0
    %v190 = vmax.f32 %v157, 0.0
    %v191 = vmax.f32 %v159, 0.0
    %v192 = vmax.f32 %v162, 0.0
    %v193 = vmax.f32 %v164, 0.0
    %v194 = vmax.f32 %v167, 0.0
    %v195 = vmax.f32 %v169, 0.0
    %v196 = vmax.f32 %v172, 0.0
    %v197 = vmax.f32 %v174, 0.0
    %v198 = vmax.f32 %v177, 0.0
    %v199 = vmax.f32 %v179, 0.0
    %v200 = vmax.f32 %v182, 0.0
    %v201 = vmax.f32 %v184, 0.0
    %v202 = vpack.c.bf16 %v187, %v186
    %v203 = vpack.c.bf16 %v189, %v188
    %v204 = vpack.c.bf16 %v191, %v190
    %v205 = vpack.c.bf16 %v193, %v192
    %v206 = vpack.c.bf16 %v195, %v194
    %v207 = vpack.c.bf16 %v197, %v196
    %v208 = vpack.c.bf16 %v199, %v198
    %v209 = vpack.c.bf16 %v201, %v200
    %v210 = vld [vmem:[%s3] sm:$0xf]
    %v211 = vld [vmem:[%s3 + $0x4] sm:$0xf]
    %v212 = vld [vmem:[%s3 + $0x8] sm:$0xf]
    %v213 = vld [vmem:[%s3 + $0xc] sm:$0xf]
    %v214 = vld [vmem:[%s3 + $0x10] sm:$0xf]
    %v215 = vld [vmem:[%s3 + $0x14] sm:$0xf]
    %v216 = vld [vmem:[%s3 + $0x18] sm:$0xf]
    %v217 = vld [vmem:[%s3 + $0x1c] sm:$0xf]
    %v218 = vld [vmem:[%s3 + $0x20] sm:$0xf]
    %v219 = vld [vmem:[%s3 + $0x24] sm:$0xf]
    %v220 = vld [vmem:[%s3 + $0x28] sm:$0xf]
    %v221 = vld [vmem:[%s3 + $0x2c] sm:$0xf]
    %v222 = vld [vmem:[%s3 + $0x30] sm:$0xf]
    %v223 = vld [vmem:[%s3 + $0x34] sm:$0xf]
    %v224 = vld [vmem:[%s3 + $0x38] sm:$0xf]
    %v225 = vld [vmem:[%s3 + $0x3c] sm:$0xf]
    %v226 = vld [vmem:[%s4] sm:$0x1]
    %v228 = vperm.slane %v226, 0
    %v246 = vunpack.c.l.b16 %v210
    %v247 = vunpack.c.l.b16 %v211
    %v248 = vunpack.c.l.b16 %v212
    %v249 = vunpack.c.l.b16 %v213
    %v250 = vunpack.c.l.b16 %v214
    %v251 = vunpack.c.l.b16 %v215
    %v252 = vunpack.c.l.b16 %v216
    %v253 = vunpack.c.l.b16 %v217
    %v254 = vunpack.c.l.b16 %v218
    %v255 = vunpack.c.l.b16 %v219
    %v256 = vunpack.c.l.b16 %v220
    %v257 = vunpack.c.l.b16 %v221
    %v258 = vunpack.c.l.b16 %v222
    %v259 = vunpack.c.l.b16 %v223
    %v260 = vunpack.c.l.b16 %v224
    %v261 = vunpack.c.l.b16 %v225
    %v262 = vpack.c.b16 %v247, %v246
    %v263 = vpack.c.b16 %v249, %v248
    %v264 = vpack.c.b16 %v251, %v250
    %v265 = vpack.c.b16 %v253, %v252
    %v266 = vpack.c.b16 %v255, %v254
    %v267 = vpack.c.b16 %v257, %v256
    %v268 = vpack.c.b16 %v259, %v258
    %v269 = vpack.c.b16 %v261, %v260
    %278 = vmatpush.bf16.msra.mxu0 %v269
    %279 = vmatpush.bf16.msra.mxu0 %v268
    %280 = vmatpush.bf16.msra.mxu0 %v267
    %281 = vmatpush.bf16.msra.mxu0 %v266
    %282 = vmatpush.bf16.msra.mxu0 %v265
    %283 = vmatpush.bf16.msra.mxu0 %v264
    %284 = vmatpush.bf16.msra.mxu0 %v263
    %285 = vmatpush.bf16.msra.mxu0 %v262
    %286 = vmatmul.bf16.gmra.mxu0 %v202
    %v287 = vpop.f32.mrf.mxu0
    %v288 = vadd.f32 %v228, %v287
    %v289 = vpop.f32.mrf.mxu0
    %v290 = vadd.f32 %v228, %v289
    %291 = vmatmul.bf16.gmra.mxu0 %v203
    %v292 = vpop.f32.mrf.mxu0
    %v293 = vadd.f32 %v228, %v292
    %v294 = vpop.f32.mrf.mxu0
    %v295 = vadd.f32 %v228, %v294
    %296 = vmatmul.bf16.gmra.mxu0 %v204
    %v297 = vpop.f32.mrf.mxu0
    %v298 = vadd.f32 %v228, %v297
    %v299 = vpop.f32.mrf.mxu0
    %v300 = vadd.f32 %v228, %v299
    %301 = vmatmul.bf16.gmra.mxu0 %v205
    %v302 = vpop.f32.mrf.mxu0
    %v303 = vadd.f32 %v228, %v302
    %v304 = vpop.f32.mrf.mxu0
    %v305 = vadd.f32 %v228, %v304
    %306 = vmatmul.bf16.gmra.mxu0 %v206
    %v307 = vpop.f32.mrf.mxu0
    %v308 = vadd.f32 %v228, %v307
    %v309 = vpop.f32.mrf.mxu0
    %v310 = vadd.f32 %v228, %v309
    %311 = vmatmul.bf16.gmra.mxu0 %v207
    %v312 = vpop.f32.mrf.mxu0
    %v313 = vadd.f32 %v228, %v312
    %v314 = vpop.f32.mrf.mxu0
    %v315 = vadd.f32 %v228, %v314
    %316 = vmatmul.bf16.gmra.mxu0 %v208
    %v317 = vpop.f32.mrf.mxu0
    %v318 = vadd.f32 %v228, %v317
    %v319 = vpop.f32.mrf.mxu0
    %v320 = vadd.f32 %v228, %v319
    %321 = vmatmul.bf16.gmra.mxu0 %v209
    %v322 = vpop.f32.mrf.mxu0
    %v323 = vadd.f32 %v228, %v322
    %v324 = vpop.f32.mrf.mxu0
    %v325 = vadd.f32 %v228, %v324
    %326 = vdwg.mxu0
    %v327 = vmax.f32 %v288, 0.0
    %v328 = vmax.f32 %v290, 0.0
    %v329 = vmax.f32 %v293, 0.0
    %v330 = vmax.f32 %v295, 0.0
    %v331 = vmax.f32 %v298, 0.0
    %v332 = vmax.f32 %v300, 0.0
    %v333 = vmax.f32 %v303, 0.0
    %v334 = vmax.f32 %v305, 0.0
    %v335 = vmax.f32 %v308, 0.0
    %v336 = vmax.f32 %v310, 0.0
    %v337 = vmax.f32 %v313, 0.0
    %v338 = vmax.f32 %v315, 0.0
    %v339 = vmax.f32 %v318, 0.0
    %v340 = vmax.f32 %v320, 0.0
    %v341 = vmax.f32 %v323, 0.0
    %v342 = vmax.f32 %v325, 0.0
    %v343 = vpack.c.bf16 %v328, %v327
    %v344 = vpack.c.bf16 %v330, %v329
    %v345 = vpack.c.bf16 %v332, %v331
    %v346 = vpack.c.bf16 %v334, %v333
    %v347 = vpack.c.bf16 %v336, %v335
    %v348 = vpack.c.bf16 %v338, %v337
    %v349 = vpack.c.bf16 %v340, %v339
    %v350 = vpack.c.bf16 %v342, %v341
    %v351 = vld [vmem:[#allocation2] sm:$0xf]
    %v352 = vld [vmem:[#allocation2 + $0x4] sm:$0xf]
    %v353 = vld [vmem:[#allocation2 + $0x8] sm:$0xf]
    %v354 = vld [vmem:[#allocation2 + $0xc] sm:$0xf]
    %v355 = vld [vmem:[#allocation2 + $0x10] sm:$0xf]
    %v356 = vld [vmem:[#allocation2 + $0x14] sm:$0xf]
    %v357 = vld [vmem:[#allocation2 + $0x18] sm:$0xf]
    %v358 = vld [vmem:[#allocation2 + $0x1c] sm:$0xf]
    %v359 = vld [vmem:[#allocation2 + $0x20] sm:$0xf]
    %v360 = vld [vmem:[#allocation2 + $0x24] sm:$0xf]
    %v361 = vld [vmem:[#allocation2 + $0x28] sm:$0xf]
    %v362 = vld [vmem:[#allocation2 + $0x2c] sm:$0xf]
    %v363 = vld [vmem:[#allocation2 + $0x30] sm:$0xf]
    %v364 = vld [vmem:[#allocation2 + $0x34] sm:$0xf]
    %v365 = vld [vmem:[#allocation2 + $0x38] sm:$0xf]
    %v366 = vld [vmem:[#allocation2 + $0x3c] sm:$0xf]
    %v367 = vld [vmem:[%s6] sm:$0x1]
    %v369 = vperm.slane %v367, 0
    %v387 = vunpack.c.l.b16 %v351
    %v388 = vunpack.c.l.b16 %v352
    %v389 = vunpack.c.l.b16 %v353
    %v390 = vunpack.c.l.b16 %v354
    %v391 = vunpack.c.l.b16 %v355
    %v392 = vunpack.c.l.b16 %v356
    %v393 = vunpack.c.l.b16 %v357
    %v394 = vunpack.c.l.b16 %v358
    %v395 = vunpack.c.l.b16 %v359
    %v396 = vunpack.c.l.b16 %v360
    %v397 = vunpack.c.l.b16 %v361
    %v398 = vunpack.c.l.b16 %v362
    %v399 = vunpack.c.l.b16 %v363
    %v400 = vunpack.c.l.b16 %v364
    %v401 = vunpack.c.l.b16 %v365
    %v402 = vunpack.c.l.b16 %v366
    %v403 = vpack.c.b16 %v388, %v387
    %v404 = vpack.c.b16 %v390, %v389
    %v405 = vpack.c.b16 %v392, %v391
    %v406 = vpack.c.b16 %v394, %v393
    %v407 = vpack.c.b16 %v396, %v395
    %v408 = vpack.c.b16 %v398, %v397
    %v409 = vpack.c.b16 %v400, %v399
    %v410 = vpack.c.b16 %v402, %v401
    %419 = vmatpush.bf16.msra.mxu0 %v410
    %420 = vmatpush.bf16.msra.mxu0 %v409
    %421 = vmatpush.bf16.msra.mxu0 %v408
    %422 = vmatpush.bf16.msra.mxu0 %v407
    %423 = vmatpush.bf16.msra.mxu0 %v406
    %424 = vmatpush.bf16.msra.mxu0 %v405
    %425 = vmatpush.bf16.msra.mxu0 %v404
    %426 = vmatpush.bf16.msra.mxu0 %v403
    %427 = vmatmul.bf16.gmra.mxu0 %v343
    %v428 = vpop.f32.mrf.mxu0
    %v429 = vadd.f32 %v369, %v428
    %v430 = vpop.f32.mrf.mxu0
    %v431 = vadd.f32 %v369, %v430
    %432 = vmatmul.bf16.gmra.mxu0 %v344
    %v433 = vpop.f32.mrf.mxu0
    %v434 = vadd.f32 %v369, %v433
    %v435 = vpop.f32.mrf.mxu0
    %v436 = vadd.f32 %v369, %v435
    %437 = vmatmul.bf16.gmra.mxu0 %v345
    %v438 = vpop.f32.mrf.mxu0
    %v439 = vadd.f32 %v369, %v438
    %v440 = vpop.f32.mrf.mxu0
    %v441 = vadd.f32 %v369, %v440
    %442 = vmatmul.bf16.gmra.mxu0 %v346
    %v443 = vpop.f32.mrf.mxu0
    %v444 = vadd.f32 %v369, %v443
    %v445 = vpop.f32.mrf.mxu0
    %v446 = vadd.f32 %v369, %v445
    %447 = vmatmul.bf16.gmra.mxu0 %v347
    %v448 = vpop.f32.mrf.mxu0
    %v449 = vadd.f32 %v369, %v448
    %v450 = vpop.f32.mrf.mxu0
    %v451 = vadd.f32 %v369, %v450
    %452 = vmatmul.bf16.gmra.mxu0 %v348
    %v453 = vpop.f32.mrf.mxu0
    %v454 = vadd.f32 %v369, %v453
    %v455 = vpop.f32.mrf.mxu0
    %v456 = vadd.f32 %v369, %v455
    %457 = vmatmul.bf16.gmra.mxu0 %v349
    %v458 = vpop.f32.mrf.mxu0
    %v459 = vadd.f32 %v369, %v458
    %v460 = vpop.f32.mrf.mxu0
    %v461 = vadd.f32 %v369, %v460
    %462 = vmatmul.bf16.gmra.mxu0 %v350
    %v463 = vpop.f32.mrf.mxu0
    %v464 = vadd.f32 %v369, %v463
    %v465 = vpop.f32.mrf.mxu0
    %v466 = vadd.f32 %v369, %v465
    %467 = vdwg.mxu0
    %468 = vmax.xlane.f32.xlu0 %v429
    %v469 = vpop.xlane.xlu0 %468
    %470 = vmax.xlane.f32.xlu0 %v431
    %v471 = vpop.xlane.xlu0 %470
    %472 = vmax.xlane.f32.xlu0 %v434
    %v473 = vpop.xlane.xlu0 %472
    %474 = vmax.xlane.f32.xlu0 %v436
    %v475 = vpop.xlane.xlu0 %474
    %476 = vmax.xlane.f32.xlu0 %v439
    %v477 = vpop.xlane.xlu0 %476
    %478 = vmax.xlane.f32.xlu0 %v441
    %v479 = vpop.xlane.xlu0 %478
    %480 = vmax.xlane.f32.xlu0 %v444
    %v481 = vpop.xlane.xlu0 %480
    %482 = vmax.xlane.f32.xlu0 %v446
    %v483 = vpop.xlane.xlu0 %482
    %484 = vmax.xlane.f32.xlu0 %v449
    %v485 = vpop.xlane.xlu0 %484
    %486 = vmax.xlane.f32.xlu0 %v451
    %v487 = vpop.xlane.xlu0 %486
    %488 = vmax.xlane.f32.xlu0 %v454
    %v489 = vpop.xlane.xlu0 %488
    %490 = vmax.xlane.f32.xlu0 %v456
    %v491 = vpop.xlane.xlu0 %490
    %492 = vmax.xlane.f32.xlu0 %v459
    %v493 = vpop.xlane.xlu0 %492
    %494 = vmax.xlane.f32.xlu0 %v461
    %v495 = vpop.xlane.xlu0 %494
    %496 = vmax.xlane.f32.xlu0 %v464
    %v497 = vpop.xlane.xlu0 %496
    %498 = vmax.xlane.f32.xlu0 %v466
    %v499 = vpop.xlane.xlu0 %498
    %v500 = vsub.f32 %v429, %v469
    %v501 = vsub.f32 %v431, %v471
    %v502 = vsub.f32 %v434, %v473
    %v503 = vsub.f32 %v436, %v475
    %v504 = vsub.f32 %v439, %v477
    %v505 = vsub.f32 %v441, %v479
    %v506 = vsub.f32 %v444, %v481
    %v507 = vsub.f32 %v446, %v483
    %v508 = vsub.f32 %v449, %v485
    %v509 = vsub.f32 %v451, %v487
    %v510 = vsub.f32 %v454, %v489
    %v511 = vsub.f32 %v456, %v491
    %v512 = vsub.f32 %v459, %v493
    %v513 = vsub.f32 %v461, %v495
    %v514 = vsub.f32 %v464, %v497
    %v515 = vsub.f32 %v466, %v499
    %v516 = vmul.f32 %v500, 1.442695
    %v517 = vpow.pop %v516
    %v518 = vmul.f32 %v501, 1.442695
    %v519 = vpow.pop %v518
    %v520 = vmul.f32 %v502, 1.442695
    %v521 = vpow.pop %v520
    %v522 = vmul.f32 %v503, 1.442695
    %v523 = vpow.pop %v522
    %v524 = vmul.f32 %v504, 1.442695
    %v525 = vpow.pop %v524
    %v526 = vmul.f32 %v505, 1.442695
    %v527 = vpow.pop %v526
    %v528 = vmul.f32 %v506, 1.442695
    %v529 = vpow.pop %v528
    %v530 = vmul.f32 %v507, 1.442695
    %v531 = vpow.pop %v530
    %v532 = vmul.f32 %v508, 1.442695
    %v533 = vpow.pop %v532
    %v534 = vmul.f32 %v509, 1.442695
    %v535 = vpow.pop %v534
    %v536 = vmul.f32 %v510, 1.442695
    %v537 = vpow.pop %v536
    %v538 = vmul.f32 %v511, 1.442695
    %v539 = vpow.pop %v538
    %v540 = vmul.f32 %v512, 1.442695
    %v541 = vpow.pop %v540
    %v542 = vmul.f32 %v513, 1.442695
    %v543 = vpow.pop %v542
    %v544 = vmul.f32 %v514, 1.442695
    %v545 = vpow.pop %v544
    %v546 = vmul.f32 %v515, 1.442695
    %v547 = vpow.pop %v546
    %548 = vadd.xlane.f32.xlu0 %v517
    %v549 = vpop.xlane.xlu0 %548
    %550 = vadd.xlane.f32.xlu0 %v519
    %v551 = vpop.xlane.xlu0 %550
    %552 = vadd.xlane.f32.xlu0 %v521
    %v553 = vpop.xlane.xlu0 %552
    %554 = vadd.xlane.f32.xlu0 %v523
    %v555 = vpop.xlane.xlu0 %554
    %556 = vadd.xlane.f32.xlu0 %v525
    %v557 = vpop.xlane.xlu0 %556
    %558 = vadd.xlane.f32.xlu0 %v527
    %v559 = vpop.xlane.xlu0 %558
    %560 = vadd.xlane.f32.xlu0 %v529
    %v561 = vpop.xlane.xlu0 %560
    %562 = vadd.xlane.f32.xlu0 %v531
    %v563 = vpop.xlane.xlu0 %562
    %564 = vadd.xlane.f32.xlu0 %v533
    %v565 = vpop.xlane.xlu0 %564
    %566 = vadd.xlane.f32.xlu0 %v535
    %v567 = vpop.xlane.xlu0 %566
    %568 = vadd.xlane.f32.xlu0 %v537
    %v569 = vpop.xlane.xlu0 %568
    %570 = vadd.xlane.f32.xlu0 %v539
    %v571 = vpop.xlane.xlu0 %570
    %572 = vadd.xlane.f32.xlu0 %v541
    %v573 = vpop.xlane.xlu0 %572
    %574 = vadd.xlane.f32.xlu0 %v543
    %v575 = vpop.xlane.xlu0 %574
    %576 = vadd.xlane.f32.xlu0 %v545
    %v577 = vpop.xlane.xlu0 %576
    %578 = vadd.xlane.f32.xlu0 %v547
    %v579 = vpop.xlane.xlu0 %578
    %v580 = vrcp.pop %v549
    %v581 = vrcp.pop %v551
    %v582 = vrcp.pop %v553
    %v583 = vrcp.pop %v555
    %v584 = vrcp.pop %v557
    %v585 = vrcp.pop %v559
    %v586 = vrcp.pop %v561
    %v587 = vrcp.pop %v563
    %v588 = vrcp.pop %v565
    %v589 = vrcp.pop %v567
    %v590 = vrcp.pop %v569
    %v591 = vrcp.pop %v571
    %v592 = vrcp.pop %v573
    %v593 = vrcp.pop %v575
    %v594 = vrcp.pop %v577
    %v595 = vrcp.pop %v579
    %v596 = vmul.f32 %v517, %v580
    %v597 = vmul.f32 %v519, %v581
    %v598 = vmul.f32 %v521, %v582
    %v599 = vmul.f32 %v523, %v583
    %v600 = vmul.f32 %v525, %v584
    %v601 = vmul.f32 %v527, %v585
    %v602 = vmul.f32 %v529, %v586
    %v603 = vmul.f32 %v531, %v587
    %v604 = vmul.f32 %v533, %v588
    %v605 = vmul.f32 %v535, %v589
    %v606 = vmul.f32 %v537, %v590
    %v607 = vmul.f32 %v539, %v591
    %v608 = vmul.f32 %v541, %v592
    %v609 = vmul.f32 %v543, %v593
    %v610 = vmul.f32 %v545, %v594
    %v611 = vmul.f32 %v547, %v595
    %612 = vst [vmem:[#allocation5] sm:$0xff] %v596
    %613 = vst [vmem:[#allocation5 + $0x8] sm:$0xff] %v597
    %614 = vst [vmem:[#allocation5 + $0x10] sm:$0xff] %v598
    %615 = vst [vmem:[#allocation5 + $0x18] sm:$0xff] %v599
    %616 = vst [vmem:[#allocation5 + $0x20] sm:$0xff] %v600
    %617 = vst [vmem:[#allocation5 + $0x28] sm:$0xff] %v601
    %618 = vst [vmem:[#allocation5 + $0x30] sm:$0xff] %v602
    %619 = vst [vmem:[#allocation5 + $0x38] sm:$0xff] %v603
    %620 = vst [vmem:[#allocation5 + $0x40] sm:$0xff] %v604
    %621 = vst [vmem:[#allocation5 + $0x48] sm:$0xff] %v605
    %622 = vst [vmem:[#allocation5 + $0x50] sm:$0xff] %v606
    %623 = vst [vmem:[#allocation5 + $0x58] sm:$0xff] %v607
    %624 = vst [vmem:[#allocation5 + $0x60] sm:$0xff] %v608
    %625 = vst [vmem:[#allocation5 + $0x68] sm:$0xff] %v609
    %626 = vst [vmem:[#allocation5 + $0x70] sm:$0xff] %v610
    %627 = vst [vmem:[#allocation5 + $0x78] sm:$0xff] %v611
    // Predicated region
    $region34: #{_pg_learner_forward_padded.1} parent=1 // pred_check
      _
    $region35: #{_pg_learner_forward_padded.1} parent=1 // pred_check_branch
      %629 = sbr.rel (0) target = $region37
    $region36: #{_pg_learner_forward_padded.1} parent=1 // pred_region
      %631 = vsyncadd [#allocation4], 0
      %s632 = sshll.u32 [#allocation5], 4
      %s633 = int_to_ptr.vmem [resolvable:$true] %s632
      %s634 = sshll.u32 %s7, 4
      %s635 = int_to_ptr.hbm [resolvable:$true] %s634
      %640 = dma.vmem_to_hbm [thread:$0]  %s633, 2048, %s635, [#allocation4], 128, 128, 8
    $region37: #{_pg_learner_forward_padded.1} parent=1 // pred_fallthru
      _
    // Predicated region
    $region38: #{_pg_learner_forward_padded.1} parent=1 // pred_check
      _
    $region39: #{_pg_learner_forward_padded.1} parent=1 // pred_check_branch
      %642 = sbr.rel (0) target = $region41
    $region40: #{_pg_learner_forward_padded.1} parent=1 // pred_region
      %644 = dma.done [#allocation4], 2048
    $region41: #{_pg_learner_forward_padded.1} parent=1 // pred_fallthru
      _
    %645 = vsyncpa [#allocation3], 1
    %646 = vsyncpa [#allocation4], 1

</llo_original>
